<compile_context>
chip_gen: v5e
topology: v5e:2x2
jax: 0.10.0
libtpu: 0.0.40
codegen_flags: <defaults>
</compile_context>

<pallas_src>
import jax
import jax.numpy as jnp
import numpy as np
from jax.experimental import pallas as pl
from jax.experimental.pallas import tpu as pltpu


def nne_decoder_kernel(hs_ref, w_ref, b_ref, out_ref):
    # hs_ref : (4, S, H)    last-4 hidden states for this batch row (B dim squeezed)
    # w_ref  : (H, LCp)     fused decoder weights (1/4 mean factor folded in)
    # b_ref  : (1, LCp)     fused decoder biases
    # out_ref: (S, LCp)     lane-dense logits tile for this batch row
    enc = jnp.sum(hs_ref[...].astype(jnp.float32), axis=0)        # f32 4-way sum (VPU)
    logits = jnp.dot(enc.astype(w_ref.dtype), w_ref[...],
                     preferred_element_type=jnp.float32)          # one MXU matmul, N = LCp
    out_ref[...] = (logits + b_ref[...]).astype(out_ref.dtype)


def nne_decode(hidden_states, weights, biases, *, compute_dtype=jnp.float32):
    """hidden_states: [4, B, S, H]; weights: [L, H, C] (= torch weight.T per layer);
    biases: [L, C].  Returns list of L arrays, each [B, C, S] (matches logits.transpose(1,2))."""
    four, B, S, H = hidden_states.shape
    L, _, C = weights.shape
    LC = L * C
    LC_pad = ((LC + 127) // 128) * 128                            # lane-align the fused output

    # Fuse the L heads and fold the mean-over-last-4 factor (1/4) into the weights.
    w_all = jnp.transpose(weights, (1, 0, 2)).reshape(H, LC) * 0.25
    b_all = biases.reshape(1, LC)
    if LC_pad != LC:
        w_all = jnp.pad(w_all, ((0, 0), (0, LC_pad - LC)))
        b_all = jnp.pad(b_all, ((0, 0), (0, LC_pad - LC)))
    w_all = w_all.astype(compute_dtype)
    b_all = b_all.astype(jnp.float32)
    hs = hidden_states.astype(compute_dtype)                      # halves hs DMA in bf16 mode

    out_full = pl.pallas_call(
        nne_decoder_kernel,
        out_shape=jax.ShapeDtypeStruct((B, S, LC_pad), jnp.float32),
        grid=(B,),
        in_specs=[
            pl.BlockSpec((four, None, S, H), lambda b: (0, b, 0, 0)),  # B dim squeezed
            pl.BlockSpec((H, LC_pad), lambda b: (0, 0)),               # resident across grid
            pl.BlockSpec((1, LC_pad), lambda b: (0, 0)),
        ],
        out_specs=pl.BlockSpec((None, S, LC_pad), lambda b: (b, 0, 0)),
        compiler_params=pltpu.CompilerParams(
            dimension_semantics=("parallel",)),
    )(hs, w_all, b_all)

    # Split per layer and apply the PyTorch transpose(1, 2) outside the kernel.
    out = out_full[:, :, :LC].reshape(B, S, L, C)
    out = jnp.transpose(out, (2, 0, 3, 1))                        # (L, B, C, S)
    return [out[i] for i in range(L)]


def tiny_lm_last4_hidden_states(input_ids, mask, embed, lm_w, lm_b):
    # TODO(synk): the pretrained wangchanberta LM has no clean in-script Pallas equivalent;
    # this is a deterministic synthetic stand-in emitting 4 hidden states of shape [B, S, H].
    x = embed[input_ids] * mask[..., None].astype(embed.dtype)        # (B, S, H)
    hs = []
    for W, b in zip(lm_w, lm_b):
        x = jnp.tanh(x @ W + b) * mask[..., None].astype(x.dtype)
        hs.append(x)
    return jnp.stack(hs, axis=0)                                      # (4, B, S, H)


if __name__ == "__main__":
    # Small shapes consistent with the module's forward.
    B, S, H = 2, 8, 32          # batch, seq, hidden_size
    L, C = 4, 48                # num_layers (decoder heads), num_classes
    VOCAB = 64

    key = jax.random.PRNGKey(0)
    k_ids, k_emb, k_lmw, k_lmb, k_w, k_b = jax.random.split(key, 6)

    # Deterministic synthetic inputs (forward(input_ids, mask)).
    input_ids = jax.random.randint(k_ids, (B, S), 0, VOCAB, dtype=jnp.int32)
    mask = jnp.ones((B, S), dtype=jnp.int32)

    # Deterministic synthetic "LM" parameters.
    embed = jax.random.normal(k_emb, (VOCAB, H), dtype=jnp.float32) * 0.1
    lm_w = jax.random.normal(k_lmw, (4, H, H), dtype=jnp.float32) * 0.1
    lm_b = jax.random.normal(k_lmb, (4, H), dtype=jnp.float32) * 0.01

    # Decoder parameters: fc1 = Linear(H, C) per layer. Stored as [L, H, C] (= weight.T).
    dec_w = jax.random.normal(k_w, (L, H, C), dtype=jnp.float32) * 0.05
    dec_b = jax.random.normal(k_b, (L, C), dtype=jnp.float32) * 0.01

    # --- forward ---
    hidden_last4 = tiny_lm_last4_hidden_states(input_ids, mask, embed, lm_w, lm_b)  # (4,B,S,H)

    # f32 path (exact PyTorch-parity numerics).
    outs_f32 = nne_decode(hidden_last4, dec_w, dec_b, compute_dtype=jnp.float32)
    outs_f32 = [jax.block_until_ready(o) for o in outs_f32]

    # bf16 matmul path (v6e/v7x fast path: bf16 operands, f32 accumulation).
    outs_bf16 = nne_decode(hidden_last4, dec_w, dec_b, compute_dtype=jnp.bfloat16)
    outs_bf16 = [jax.block_until_ready(o) for o in outs_bf16]

    # Pure-JAX reference for correctness (the PyTorch math).
    enc_ref = jnp.mean(hidden_last4, axis=0)                           # (B, S, H)
    for i in range(L):
        ref = jnp.einsum("bsh,hc->bsc", enc_ref, dec_w[i]) + dec_b[i]  # (B, S, C)
        ref = jnp.transpose(ref, (0, 2, 1))                            # (B, C, S)
        np.testing.assert_allclose(np.asarray(outs_f32[i]), np.asarray(ref),
                                   rtol=1e-5, atol=1e-5)
        np.testing.assert_allclose(np.asarray(outs_bf16[i]), np.asarray(ref),
                                   rtol=2e-2, atol=2e-3)

    print("KERNEL_OK")
</pallas_src>

<mosaic_0001>
module attributes {stable_mosaic.version = 11 : i64} {
  func.func @nne_decoder_kernel(%arg0: i32, %arg1: memref<4x1x8x32xf32, #tpu.memory_space<vmem>>, %arg2: memref<32x256xf32, #tpu.memory_space<vmem>>, %arg3: memref<1x256xf32, #tpu.memory_space<vmem>>, %arg4: memref<1x8x256xf32, #tpu.memory_space<vmem>>) attributes {dimension_semantics = [#tpu.dimension_semantics<parallel>], iteration_bounds = array<i64: 2>, scalar_prefetch = 0 : i64, scratch_operands = 0 : i64, tpu.core_type = #tpu.core_type<tc>, window_params = [{transform_indices = @transform_0, window_bounds = array<i64: 4, 1, 8, 32>}, {pipeline_mode = #tpu.pipeline_mode<synchronous>, transform_indices = @transform_1, window_bounds = array<i64: 32, 256>}, {pipeline_mode = #tpu.pipeline_mode<synchronous>, transform_indices = @transform_2, window_bounds = array<i64: 1, 256>}, {transform_indices = @transform_3, window_bounds = array<i64: 1, 8, 256>}]} {
    %c0 = arith.constant 0 : index
    %c0_0 = arith.constant 0 : index
    %c0_1 = arith.constant 0 : index
    %c0_2 = arith.constant 0 : index
    %0 = vector.load %arg1[%c0, %c0_0, %c0_1, %c0_2] : memref<4x1x8x32xf32, #tpu.memory_space<vmem>>, vector<4x1x8x32xf32>
    %1 = vector.shape_cast %0 : vector<4x1x8x32xf32> to vector<4x8x32xf32>
    %cst = arith.constant dense<0.000000e+00> : vector<8x32xf32>
    %2 = vector.multi_reduction <add>, %1, %cst [0] : vector<4x8x32xf32> to vector<8x32xf32>
    %c0_3 = arith.constant 0 : index
    %c0_4 = arith.constant 0 : index
    %3 = vector.load %arg2[%c0_3, %c0_4] : memref<32x256xf32, #tpu.memory_space<vmem>>, vector<32x256xf32>
    %cst_5 = arith.constant dense<0.000000e+00> : vector<8x256xf32>
    %4 = tpu.matmul %2, %3, %cst_5 {dimension_numbers = #tpu.dot_dimension_numbers<[1], [0], [0], [1], [0, 0, 1, 1], [], []>} : vector<8x32xf32>, vector<32x256xf32>, vector<8x256xf32> -> vector<8x256xf32>
    %c0_6 = arith.constant 0 : index
    %c0_7 = arith.constant 0 : index
    %5 = vector.load %arg3[%c0_6, %c0_7] : memref<1x256xf32, #tpu.memory_space<vmem>>, vector<1x256xf32>
    %6 = vector.broadcast %5 : vector<1x256xf32> to vector<8x256xf32>
    %7 = arith.addf %4, %6 : vector<8x256xf32>
    %c0_8 = arith.constant 0 : index
    %c0_9 = arith.constant 0 : index
    %c0_10 = arith.constant 0 : index
    %8 = vector.load %arg4[%c0_8, %c0_9, %c0_10] : memref<1x8x256xf32, #tpu.memory_space<vmem>>, vector<1x8x256xf32>
    %9 = vector.shape_cast %8 : vector<1x8x256xf32> to vector<8x256xf32>
    %10 = vector.shape_cast %7 : vector<8x256xf32> to vector<1x8x256xf32>
    tpu.vector_store %arg4[%c0_8, %c0_9, %c0_10], %10 {strides = array<i32>} : memref<1x8x256xf32, #tpu.memory_space<vmem>>, vector<1x8x256xf32>,
    return
  }
  func.func @transform_0(%arg0: i32) -> (i32, i32, i32, i32) {
    %c0_i32 = arith.constant 0 : i32
    %c0_i32_0 = arith.constant 0 : i32
    %c0_i32_1 = arith.constant 0 : i32
    %c0_i32_2 = arith.constant 0 : i32
    return %c0_i32, %arg0, %c0_i32_0, %c0_i32_1 : i32, i32, i32, i32
  }
  func.func @transform_1(%arg0: i32) -> (i32, i32) {
    %c0_i32 = arith.constant 0 : i32
    %c0_i32_0 = arith.constant 0 : i32
    %c0_i32_1 = arith.constant 0 : i32
    return %c0_i32, %c0_i32_0 : i32, i32
  }
  func.func @transform_2(%arg0: i32) -> (i32, i32) {
    %c0_i32 = arith.constant 0 : i32
    %c0_i32_0 = arith.constant 0 : i32
    %c0_i32_1 = arith.constant 0 : i32
    return %c0_i32, %c0_i32_0 : i32, i32
  }
  func.func @transform_3(%arg0: i32) -> (i32, i32, i32) {
    %c0_i32 = arith.constant 0 : i32
    %c0_i32_0 = arith.constant 0 : i32
    %c0_i32_1 = arith.constant 0 : i32
    return %arg0, %c0_i32, %c0_i32_0 : i32, i32, i32
  }
}

</mosaic_0001>

<llo_original>
// kernel: tpu_custom_call.1
$region0: #{tpu_custom_call.1}
  #allocation0 [shape = 'u32[]', space=smem, size = 0x4, offset = 0x4, fixed_abs, tag = 'smem constant byte address 0x4 - core index']
  #allocation1 [shape = 'u32[72,128]{1,0:T(1,128)}', space=vmem, size = 0x9000, scoped, tag = 'internal scratch']
  %s0 = inlined_call_operand.hbm [shape: f32[4,2,8,32], index: 0, kind: input, shape index: {}]
  %s1 = inlined_call_operand.hbm [shape: f32[32,256], index: 1, kind: input, shape index: {}]
  %s2 = inlined_call_operand.hbm [shape: f32[1,256], index: 2, kind: input, shape index: {}]
  %s3 = inlined_call_operand.hbm [shape: f32[2,8,256], index: 3, kind: output, shape index: {}]
  %s4 = sld [smem:[#allocation0]]
  $region57: #{tpu_custom_call.1} parent=0
    _
  %s6 = ssub.s32 1, %s4
  %s7 = scalar_select 0, %s6, %s4
  $region1: #{tpu_custom_call.1} parent=0
    #allocation2 [shape = 'u8[32768]{0}', space=vmem, size = 0x8000, scoped, tag = 'input window, operand 0']
    #allocation3 [shape = 's32[2]{0}', space=sflag, size = 0x8, scoped, tag = 'scoped memory for tpu_custom_call.1']
    #allocation4 [shape = 's32[2]{0}', space=sflag, size = 0x8, scoped, tag = 'scoped memory for tpu_custom_call.1']
    #allocation5 [shape = 'u8[32768]{0}', space=vmem, size = 0x8000, scoped, tag = 'input window, operand 1, single buffered']
    #allocation6 [shape = 's32[1]{0}', space=sflag, size = 0x4, scoped, tag = 'scoped memory for tpu_custom_call.1']
    #allocation7 [shape = 'u8[1024]{0}', space=vmem, size = 0x400, scoped, tag = 'input window, operand 2, single buffered']
    #allocation8 [shape = 'u8[16384]{0}', space=vmem, size = 0x4000, scoped, tag = 'output window, operand 0']
    %8 = vsyncpa [#allocation3], 0
    %s9 = scalar_lea.sflag [#allocation3], 1
    %10 = vsyncpa %s9, 0
    %11 = vsyncpa [#allocation6], 0
    %12 = vsyncpa [#allocation4], 0
    %s13 = scalar_lea.sflag [#allocation4], 1
    %14 = vsyncpa %s13, 0
    loop: start=0, step=1, limit=4
    $region2: #{tpu_custom_call.1} parent=1 // loop_pre_header
      _
    $region3: #{tpu_custom_call.1} parent=1 // loop_header
      %s16 = sphi 0, %s20
      %p17 = scmp.ge.s32.totalorder %s16, 4
      %s26 = sphi 0, %s28
      %s29 = sphi 0, %s26
      %s30 = sphi 0, %s29
      %s46 = sphi 0, %s30
      %s50 = sphi 0, %s50
      %s52 = sphi 0, %s50
      %s53 = sphi 0, %s52
      %s67 = sphi 0, %s53
      %s71 = sphi 0, %s71
      %s73 = sphi 0, %s71
      %s74 = sphi 0, %s73
      %s88 = sphi 0, %s74
      %s94 = sphi 0, %s96
      %s97 = sphi 0, %s94
      %s98 = sphi 0, %s97
      %s114 = sphi 0, %s98
    $region4: #{tpu_custom_call.1} parent=1 // loop_header_branch
      %19 = sbr.rel (%p17) target = $region8
    $region5: #{tpu_custom_call.1} parent=1 // loop_body
      %s21 = ssub.s32 %s16, 1
      %s22 = ssub.s32 %s16, 2
      %s23 = sadd.s32 %s16, 1
      %s24 = ssub.s32 %s16, %s23
      %p25 = scmp.eq.s32.totalorder %s24, 0
      %s27 = sadd.s32 %s26, 1
      %s28 = scalar_select %p25, %s26, %s27
      %p31 = pneg %p25
      %p32 = scmp.eq.s32.totalorder %s16, 1
      %p33 = por %p31, %p32
      %p34 = scmp.ne.s32.totalorder %s26, %s29
      %p35 = scmp.eq.s32.totalorder %s16, 0
      %p36 = por %p34, %p35
      %p37 = scmp.ne.s32.totalorder %s26, %s29
      %p38 = scmp.eq.s32.totalorder %s21, 1
      %p39 = por %p37, %p38
      %p40 = scmp.ne.s32.totalorder %s29, %s30
      %p41 = scmp.eq.s32.totalorder %s21, 0
      %p42 = por %p40, %p41
      %p43 = scmp.ne.s32.totalorder %s29, %s30
      %p44 = scmp.eq.s32.totalorder %s22, 1
      %p45 = por %p43, %p44
      %p47 = scmp.ne.s32.totalorder %s30, %s46
      %p48 = scmp.eq.s32.totalorder %s22, 0
      %p49 = por %p47, %p48
      %s51 = sadd.s32 %s50, 1
      %p54 = scmp.eq.s32.totalorder %s16, 1
      %p55 = scmp.ne.s32.totalorder %s50, %s52
      %p56 = scmp.eq.s32.totalorder %s16, 0
      %p57 = por %p55, %p56
      %p58 = scmp.ne.s32.totalorder %s50, %s52
      %p59 = scmp.eq.s32.totalorder %s21, 1
      %p60 = por %p58, %p59
      %p61 = scmp.ne.s32.totalorder %s52, %s53
      %p62 = scmp.eq.s32.totalorder %s21, 0
      %p63 = por %p61, %p62
      %p64 = scmp.ne.s32.totalorder %s52, %s53
      %p65 = scmp.eq.s32.totalorder %s22, 1
      %p66 = por %p64, %p65
      %p68 = scmp.ne.s32.totalorder %s53, %s67
      %p69 = scmp.eq.s32.totalorder %s22, 0
      %p70 = por %p68, %p69
      %s72 = sadd.s32 %s71, 1
      %p75 = scmp.eq.s32.totalorder %s16, 1
      %p76 = scmp.ne.s32.totalorder %s71, %s73
      %p77 = scmp.eq.s32.totalorder %s16, 0
      %p78 = por %p76, %p77
      %p79 = scmp.ne.s32.totalorder %s71, %s73
      %p80 = scmp.eq.s32.totalorder %s21, 1
      %p81 = por %p79, %p80
      %p82 = scmp.ne.s32.totalorder %s73, %s74
      %p83 = scmp.eq.s32.totalorder %s21, 0
      %p84 = por %p82, %p83
      %p85 = scmp.ne.s32.totalorder %s73, %s74
      %p86 = scmp.eq.s32.totalorder %s22, 1
      %p87 = por %p85, %p86
      %p89 = scmp.ne.s32.totalorder %s74, %s88
      %p90 = scmp.eq.s32.totalorder %s22, 0
      %p91 = por %p89, %p90
      %s92 = ssub.s32 %s16, %s23
      %p93 = scmp.eq.s32.totalorder %s92, 0
      %s95 = sadd.s32 %s94, 1
      %s96 = scalar_select %p93, %s94, %s95
      %p99 = pneg %p93
      %p100 = scmp.eq.s32.totalorder %s16, 1
      %p101 = por %p99, %p100
      %p102 = scmp.ne.s32.totalorder %s94, %s97
      %p103 = scmp.eq.s32.totalorder %s16, 0
      %p104 = por %p102, %p103
      %p105 = scmp.ne.s32.totalorder %s94, %s97
      %p106 = scmp.eq.s32.totalorder %s21, 1
      %p107 = por %p105, %p106
      %p108 = scmp.ne.s32.totalorder %s97, %s98
      %p109 = scmp.eq.s32.totalorder %s21, 0
      %p110 = por %p108, %p109
      %p111 = scmp.ne.s32.totalorder %s97, %s98
      %p112 = scmp.eq.s32.totalorder %s22, 1
      %p113 = por %p111, %p112
      %p115 = scmp.ne.s32.totalorder %s98, %s114
      %p116 = scmp.eq.s32.totalorder %s22, 0
      %p117 = por %p115, %p116
      %p118 = scmp.le.s32.totalorder 1, %s16
      %p119 = scmp.lt.s32.totalorder %s16, 3
      %p120 = pnand %p118, %p119
      %p121 = pneg %p120
      // Predicated region
      $region9: #{tpu_custom_call.1} parent=5 // pred_check
        _
      $region10: #{tpu_custom_call.1} parent=5 // pred_check_branch
        %123 = sbr.rel (%p120) target = $region12
      $region11: #{tpu_custom_call.1} parent=5 // pred_region
        %s124 = ssub.s32 %s16, 1
        // Predicated region
        $region13: #{tpu_custom_call.1} parent=11 // pred_check
          %p125 = pneg %p63
        $region14: #{tpu_custom_call.1} parent=11 // pred_check_branch
          %127 = sbr.rel (%p125) target = $region16
        $region15: #{tpu_custom_call.1} parent=11 // pred_region
          %129 = vsyncadd [#allocation6], 0
          %s130 = sshll.u32 %s1, 4
          %s131 = int_to_ptr.hbm [resolvable:$true] %s130
          %s132 = sshll.u32 [#allocation5], 4
          %s133 = int_to_ptr.vmem [resolvable:$true] %s132
          %138 = dma.hbm_to_vmem [thread:$0]  %s131, 1024, %s133, [#allocation6], 256, 256, 16
        $region16: #{tpu_custom_call.1} parent=11 // pred_fallthru
          _
        // Predicated region
        $region17: #{tpu_custom_call.1} parent=11 // pred_check
          %p139 = pneg %p84
        $region18: #{tpu_custom_call.1} parent=11 // pred_check_branch
          %141 = sbr.rel (%p139) target = $region20
        $region19: #{tpu_custom_call.1} parent=11 // pred_region
          %143 = vsyncadd [#allocation6], 0
          %s145 = sshll.u32 %s2, 4
          %s146 = int_to_ptr.hbm [resolvable:$true] %s145
          %s147 = sshll.u32 [#allocation7], 4
          %s148 = int_to_ptr.vmem [resolvable:$true] %s147
          %150 = dma.hbm_to_vmem [thread:$0]  %s146, 32, %s148, [#allocation6]
        $region20: #{tpu_custom_call.1} parent=11 // pred_fallthru
          _
      $region12: #{tpu_custom_call.1} parent=5 // pred_fallthru
        _
      %p151 = scmp.lt.s32.totalorder %s16, 2
      // Predicated region
      $region21: #{tpu_custom_call.1} parent=5 // pred_check
        %p152 = pneg %p151
      $region22: #{tpu_custom_call.1} parent=5 // pred_check_branch
        %154 = sbr.rel (%p152) target = $region24
      $region23: #{tpu_custom_call.1} parent=5 // pred_region
        // Predicated region
        $region25: #{tpu_custom_call.1} parent=23 // pred_check
          %p155 = pneg %p36
        $region26: #{tpu_custom_call.1} parent=23 // pred_check_branch
          %157 = sbr.rel (%p155) target = $region28
        $region27: #{tpu_custom_call.1} parent=23 // pred_region
          %s158 = sand.u32 %s26, 1
          %s159 = scalar_lea.sflag [#allocation3], %s158
          %s160 = sand.u32 %s26, 1
          %s161 = smul.addr %s160, 32
          %s162 = scalar_lea.vmem [#allocation2], %s161
          %164 = vsyncadd %s159, 0
          %s165 = smul.addr %s16, 8
          %s166 = scalar_lea.hbm %s0, %s165
          %s167 = sshll.u32 %s166, 4
          %s168 = int_to_ptr.hbm [resolvable:$true] %s167
          %s169 = sshll.u32 %s162, 4
          %s170 = int_to_ptr.vmem [resolvable:$true] %s169
          %175 = dma.hbm_to_vmem [thread:$0]  %s168, 512, %s170, %s159, 256, 128, 8
        $region28: #{tpu_custom_call.1} parent=23 // pred_fallthru
          _
      $region24: #{tpu_custom_call.1} parent=5 // pred_fallthru
        _
      %p176 = scmp.le.s32.totalorder 1, %s16
      %p177 = scmp.lt.s32.totalorder %s16, 3
      %p178 = pnand %p176, %p177
      %p179 = pneg %p178
      // Predicated region
      $region29: #{tpu_custom_call.1} parent=5 // pred_check
        _
      $region30: #{tpu_custom_call.1} parent=5 // pred_check_branch
        %181 = sbr.rel (%p178) target = $region32
      $region31: #{tpu_custom_call.1} parent=5 // pred_region
        %s182 = ssub.s32 %s16, 1
        %s183 = sand.u32 %s29, 1
        %s184 = scalar_lea.sflag [#allocation3], %s183
        %s185 = sand.u32 %s29, 1
        %s186 = smul.addr %s185, 32
        %s187 = scalar_lea.vmem [#allocation2], %s186
        // Predicated region
        $region33: #{tpu_custom_call.1} parent=31 // pred_check
          %p188 = pneg %p42
        $region34: #{tpu_custom_call.1} parent=31 // pred_check_branch
          %190 = sbr.rel (%p188) target = $region36
        $region35: #{tpu_custom_call.1} parent=31 // pred_region
          %192 = dma.done %s184, 512
        $region36: #{tpu_custom_call.1} parent=31 // pred_fallthru
          _
        // Predicated region
        $region37: #{tpu_custom_call.1} parent=31 // pred_check
          %p193 = pneg %p63
        $region38: #{tpu_custom_call.1} parent=31 // pred_check_branch
          %195 = sbr.rel (%p193) target = $region40
        $region39: #{tpu_custom_call.1} parent=31 // pred_region
          %197 = dma.done [#allocation6], 1024
        $region40: #{tpu_custom_call.1} parent=31 // pred_fallthru
          _
        // Predicated region
        $region41: #{tpu_custom_call.1} parent=31 // pred_check
          %p198 = pneg %p84
        $region42: #{tpu_custom_call.1} parent=31 // pred_check_branch
          %200 = sbr.rel (%p198) target = $region44
        $region43: #{tpu_custom_call.1} parent=31 // pred_region
          %202 = dma.done [#allocation6], 32
        $region44: #{tpu_custom_call.1} parent=31 // pred_fallthru
          _
        %s203 = sand.u32 %s29, 1
        %s204 = scalar_lea.sflag [#allocation3], %s203
        %s205 = sand.u32 %s29, 1
        %s206 = smul.addr %s205, 32
        %s207 = scalar_lea.vmem [#allocation2], %s206
        %p208 = pneg %p42
        %p209 = pneg %p39
        %p210 = pneg %p63
        %p211 = pneg %p60
        %p212 = pneg %p84
        %p213 = pneg %p81
        %p214 = pneg %p110
        %p215 = pneg %p107
        %s216 = sand.u32 %s97, 1
        %s217 = scalar_lea.sflag [#allocation4], %s216
        %s218 = sand.u32 %s97, 1
        %s219 = smul.addr %s218, 16
        %s220 = scalar_lea.vmem [#allocation8], %s219
        %v221 = vld [vmem:[%s187] sm:$0xff]
        %v222 = vld [vmem:[%s187 + $0x8] sm:$0xff]
        %v223 = vld [vmem:[%s187 + $0x10] sm:$0xff]
        %v224 = vld [vmem:[%s187 + $0x18] sm:$0xff]
        %vm225 = vcmask 261120
        %v226 = vsel %vm225, %v221, 0.0
        %v227 = vsel %vm225, %v222, 0.0
        %v228 = vadd.f32 %v226, %v227
        %v229 = vsel %vm225, %v223, 0.0
        %v230 = vadd.f32 %v228, %v229
        %v231 = vsel %vm225, %v224, 0.0
        %v232 = vadd.f32 %v230, %v231
        %v233 = vld [vmem:[#allocation5] sm:$0xff]
        %v234 = vld [vmem:[#allocation5 + $0x8] sm:$0xff]
        %v235 = vld [vmem:[#allocation5 + $0x10] sm:$0xff]
        %v236 = vld [vmem:[#allocation5 + $0x18] sm:$0xff]
        %v237 = vld [vmem:[#allocation5 + $0x20] sm:$0xff]
        %v238 = vld [vmem:[#allocation5 + $0x28] sm:$0xff]
        %v239 = vld [vmem:[#allocation5 + $0x30] sm:$0xff]
        %v240 = vld [vmem:[#allocation5 + $0x38] sm:$0xff]
        %v241 = vld [vmem:[#allocation7] sm:$0x3]
        %v243 = vperm.slane %v241, 0
        %v244 = vperm.slane %v241, 1
        %v248 = vsel %vm225, %v232, 0
        %250 = vmatpush.msra.mxu0 0.0
        %251 = vmatpush.msra.mxu0 0.0
        %252 = vmatpush.msra.mxu0 0.0
        %253 = vmatpush.msra.mxu0 0.0
        %254 = vmatpush.msra.mxu0 0.0
        %255 = vmatpush.msra.mxu0 0.0
        %256 = vmatpush.msra.mxu0 0.0
        %257 = vmatpush.msra.mxu0 0.0
        %258 = vmatpush.msra.mxu0 0.0
        %259 = vmatpush.msra.mxu0 0.0
        %260 = vmatpush.msra.mxu0 0.0
        %261 = vmatpush.msra.mxu0 0.0
        %262 = vmatpush.msra.mxu0 %v239
        %263 = vmatpush.msra.mxu0 %v237
        %264 = vmatpush.msra.mxu0 %v235
        %265 = vmatpush.msra.mxu0 %v233
        %266 = vmatmul.f32.gmra.mxu0 %v248
        %v267 = vpop.f32.mrf.mxu0
        %v268 = vadd.f32 %v243, %v267
        %269 = vdwg.mxu0
        %270 = vmatpush.msra.mxu0 0.0
        %271 = vmatpush.msra.mxu0 0.0
        %272 = vmatpush.msra.mxu0 0.0
        %273 = vmatpush.msra.mxu0 0.0
        %274 = vmatpush.msra.mxu0 0.0
        %275 = vmatpush.msra.mxu0 0.0
        %276 = vmatpush.msra.mxu0 0.0
        %277 = vmatpush.msra.mxu0 0.0
        %278 = vmatpush.msra.mxu0 0.0
        %279 = vmatpush.msra.mxu0 0.0
        %280 = vmatpush.msra.mxu0 0.0
        %281 = vmatpush.msra.mxu0 0.0
        %282 = vmatpush.msra.mxu0 %v240
        %283 = vmatpush.msra.mxu0 %v238
        %284 = vmatpush.msra.mxu0 %v236
        %285 = vmatpush.msra.mxu0 %v234
        %286 = vmatmul.f32.gmra.mxu0 %v248
        %v287 = vpop.f32.mrf.mxu0
        %v288 = vadd.f32 %v244, %v287
        %289 = vdwg.mxu0
        %290 = vst [vmem:[%s220] sm:$0xff] %v268
        %291 = vst [vmem:[%s220 + $0x8] sm:$0xff] %v288
        %s292 = sand.u32 %s97, 1
        %s293 = scalar_lea.sflag [#allocation4], %s292
        %s294 = sand.u32 %s97, 1
        %s295 = smul.addr %s294, 16
        %s296 = scalar_lea.vmem [#allocation8], %s295
        // Predicated region
        $region45: #{tpu_custom_call.1} parent=31 // pred_check
          %p297 = pneg %p107
        $region46: #{tpu_custom_call.1} parent=31 // pred_check_branch
          %299 = sbr.rel (%p297) target = $region48
        $region47: #{tpu_custom_call.1} parent=31 // pred_region
          %301 = vsyncadd %s293, 0
          %s302 = smul.addr %s21, 2
          %s303 = smul.addr %s302, 8
          %s304 = scalar_lea.hbm %s3, %s303
          %s306 = sshll.u32 %s296, 4
          %s307 = int_to_ptr.vmem [resolvable:$true] %s306
          %s308 = sshll.u32 %s304, 4
          %s309 = int_to_ptr.hbm [resolvable:$true] %s308
          %311 = dma.vmem_to_hbm [thread:$0]  %s307, 256, %s309, %s293
        $region48: #{tpu_custom_call.1} parent=31 // pred_fallthru
          _
      $region32: #{tpu_custom_call.1} parent=5 // pred_fallthru
        _
      %p312 = scmp.le.s32.totalorder 2, %s16
      // Predicated region
      $region49: #{tpu_custom_call.1} parent=5 // pred_check
        %p313 = pneg %p312
      $region50: #{tpu_custom_call.1} parent=5 // pred_check_branch
        %315 = sbr.rel (%p313) target = $region52
      $region51: #{tpu_custom_call.1} parent=5 // pred_region
        %s316 = ssub.s32 %s16, 2
        // Predicated region
        $region53: #{tpu_custom_call.1} parent=51 // pred_check
          %p317 = pneg %p113
        $region54: #{tpu_custom_call.1} parent=51 // pred_check_branch
          %319 = sbr.rel (%p317) target = $region56
        $region55: #{tpu_custom_call.1} parent=51 // pred_region
          %s320 = sand.u32 %s98, 1
          %s321 = scalar_lea.sflag [#allocation4], %s320
          %s322 = sand.u32 %s98, 1
          %s323 = smul.addr %s322, 16
          %s324 = scalar_lea.vmem [#allocation8], %s323
          %326 = dma.done %s321, 256
        $region56: #{tpu_custom_call.1} parent=51 // pred_fallthru
          _
      $region52: #{tpu_custom_call.1} parent=5 // pred_fallthru
        _
    $region6: #{tpu_custom_call.1} parent=1 // loop_footer
      %s20 = sadd.s32 1, %s16
    $region7: #{tpu_custom_call.1} parent=1 // loop_footer_branch
      %15 = sbr.rel target = $region3
    $region8: #{tpu_custom_call.1} parent=1 // loop_exit
      _
    %327 = vsyncpa [#allocation3], 1
    %s328 = scalar_lea.sflag [#allocation3], 1
    %329 = vsyncpa %s328, 1
    %330 = vsyncpa [#allocation6], 1
    %331 = vsyncpa [#allocation4], 1
    %s332 = scalar_lea.sflag [#allocation4], 1
    %333 = vsyncpa %s332, 1

</llo_original>
